<compile_context>
chip_gen: v7x
topology: tpu7x:2x2x1
jax: 0.10.0
libtpu: 0.0.40
codegen_flags: <defaults>
</compile_context>

<pallas_src>
import functools

import jax
import jax.numpy as jnp
from jax.experimental import pallas as pl
from jax.experimental.pallas import tpu as pltpu

LANE = 128      # vreg lane width (last dim)
SUBLANE = 8     # vreg sublane height (second-last dim, f32)


def _round_up(n: int, m: int) -> int:
    return ((n + m - 1) // m) * m


def _feature_pad(d: int) -> int:
    """Lane-dense padding for a feature axis.

    <=128 -> one 128-lane vreg (already saturates v5e's 128-wide MXU);
    >128  -> multiple of 256 so the 2x256x256 MXU on v6e/v7x is fully fed.
    """
    return _round_up(d, LANE) if d <= LANE else _round_up(d, 2 * LANE)


def _mlp_fused_kernel(*refs, num_layers: int):
    """Fused MLP body.

    refs = (x_ref, w0, b0, w1, b1, ..., w_{L-1}, b_{L-1}, o_ref)
    Chains all matmuls on the MXU (bf16 in, f32 accumulate); intermediates
    stay resident on-chip.
    """
    x_ref = refs[0]
    o_ref = refs[1 + 2 * num_layers]

    h = x_ref[...]                         # bf16 (tb, Din_p) batch tile
    for l in range(num_layers):
        w = refs[1 + 2 * l][...]           # bf16 (Din_p_l, Dout_p_l)
        b = refs[2 + 2 * l][...]           # f32  (1, Dout_p_l) -> broadcasts over batch
        y = jnp.dot(h, w, preferred_element_type=jnp.float32) + b
        if l < num_layers - 1:
            # Exact sigmoid: 0.5*tanh(0.5*y)+0.5 — a single EUP op + two VPU ops.
            y = 0.5 * jnp.tanh(0.5 * y) + 0.5
            h = y.astype(jnp.bfloat16)     # bf16 into the next MXU matmul
        else:
            h = y                          # final layer stays f32 (no activation)
    o_ref[...] = h.astype(o_ref.dtype)


def init_mlp_params(key, input_size, hidden_layers, output_size):
    """xavier_normal weights (module default), zero biases.  Weights stored as
    (in_features, out_features) so the kernel computes y = x @ W + b directly."""
    sizes = [input_size] + list(hidden_layers) + [output_size]
    params = []
    for i in range(len(sizes) - 1):
        fan_in, fan_out = sizes[i], sizes[i + 1]
        key, sub = jax.random.split(key)
        std = (2.0 / (fan_in + fan_out)) ** 0.5
        w = (jax.random.normal(sub, (fan_in, fan_out)) * std).astype(jnp.float32)
        b = jnp.zeros((fan_out,), jnp.float32)
        params.append((w, b))
    return params


def pad_mlp_params(params):
    """Zero-pad each (w, b) lane-dense and cast weights to bf16 ONCE here.

    Padded rows/cols are exact zeros, so padded lanes never pollute real lanes
    (sigmoid(0)=0.5 on a padded lane is killed by the next layer's zero rows).
    Biases stay f32 since they add onto the f32 accumulator.
    """
    padded = []
    for w, b in params:
        din, dout = w.shape
        din_p, dout_p = _feature_pad(din), _feature_pad(dout)
        w_p = jnp.zeros((din_p, dout_p), jnp.bfloat16).at[:din, :dout].set(
            w.astype(jnp.bfloat16))
        b_p = jnp.zeros((1, dout_p), jnp.float32).at[:, :dout].set(
            b.reshape(1, -1))
        padded.append((w_p, b_p))
    return padded


def mlp_forward(x, padded_params, output_size, *, tile_b=512):
    """Matches MLP.forward: hidden layers get sigmoid, last layer is linear."""
    B, Din = x.shape
    Din_p = padded_params[0][0].shape[0]
    Dout_p = padded_params[-1][0].shape[1]
    num_layers = len(padded_params)

    # Batch tiling: multiple of 8 sublanes, capped at tile_b.  Large tiles
    # amortize the ~0.35us/step grid overhead; for big B the grid has >1
    # program and the "parallel" axis shards across both v7x TensorCores.
    tb = min(_round_up(B, SUBLANE), _round_up(tile_b, SUBLANE))
    B_p = _round_up(B, tb)

    # bf16 input halves the HBM->VMEM activation traffic; padding is zero.
    x_p = jnp.zeros((B_p, Din_p), jnp.bfloat16).at[:B, :Din].set(
        x.astype(jnp.bfloat16))

    # Weights/biases are grid-invariant (index_map always (0,0)) -> single-buffer
    # them so they don't occupy 2x VMEM.
    const_buf = pl.Buffered(1)
    in_specs = [pl.BlockSpec((tb, Din_p), lambda i: (i, 0))]
    flat_inputs = [x_p]
    for w_p, b_p in padded_params:
        in_specs.append(pl.BlockSpec(w_p.shape, lambda i: (0, 0),
                                     pipeline_mode=const_buf))
        in_specs.append(pl.BlockSpec(b_p.shape, lambda i: (0, 0),
                                     pipeline_mode=const_buf))
        flat_inputs += [w_p, b_p]

    # Explicit VMEM budget: single-buffered weights + double-buffered activation
    # tiles + f32 intermediates + headroom, clamped to v7x's 64 MiB per TC.
    weight_bytes = sum(int(w.size) * w.dtype.itemsize + int(b.size) * b.dtype.itemsize
                       for w, b in padded_params)
    widest = max(max(w.shape) for w, _ in padded_params)
    act_bytes = 2 * (tb * Din_p * 2 + tb * Dout_p * 4)   # double-buffered in/out tiles
    interm_bytes = 4 * tb * widest * 4                    # f32 temporaries
    vmem_limit = int(min(max(weight_bytes + act_bytes + interm_bytes + (8 << 20),
                             16 << 20), 64 << 20))

    kernel = functools.partial(_mlp_fused_kernel, num_layers=num_layers)
    out_p = pl.pallas_call(
        kernel,
        out_shape=jax.ShapeDtypeStruct((B_p, Dout_p), jnp.float32),
        grid=(B_p // tb,),
        in_specs=in_specs,
        out_specs=pl.BlockSpec((tb, Dout_p), lambda i: (i, 0)),
        compiler_params=pltpu.CompilerParams(
            dimension_semantics=("parallel",),
            vmem_limit_bytes=vmem_limit),
    )(*flat_inputs)

    return out_p[:B, :output_size]


def mlp_forward_ref(x, params):
    """Pure-JAX f32 reference (exact sigmoid) for correctness checking."""
    for w, b in params[:-1]:
        x = jax.nn.sigmoid(x @ w + b)
    w, b = params[-1]
    return x @ w + b


if __name__ == "__main__":
    # Shapes consistent with the module: MLP(input_size=16, hidden_layers=[32, 32], output_size=8)
    batch = 8
    input_size = 16
    hidden_layers = [32, 32]
    output_size = 8

    key = jax.random.PRNGKey(0)
    key, xkey = jax.random.split(key)
    x = jax.random.normal(xkey, (batch, input_size), dtype=jnp.float32)

    params = init_mlp_params(key, input_size, hidden_layers, output_size)
    padded_params = pad_mlp_params(params)

    out = jax.block_until_ready(mlp_forward(x, padded_params, output_size))
    ref = mlp_forward_ref(x, params)

    assert out.shape == (batch, output_size)
    # bf16 MXU inputs with f32 accumulation and exact sigmoid -> bf16-appropriate bound.
    max_err = float(jnp.max(jnp.abs(out - ref)))
    assert jnp.allclose(out, ref, atol=3e-2, rtol=3e-2), f"max_err={max_err}"

    print("KERNEL_OK")
</pallas_src>

<mosaic_0001>
module attributes {stable_mosaic.version = 11 : i64} {
  func.func @_mlp_fused_kernel(%arg0: i32, %arg1: memref<8x128xbf16, #tpu.memory_space<vmem>>, %arg2: memref<128x128xbf16, #tpu.memory_space<vmem>>, %arg3: memref<1x128xf32, #tpu.memory_space<vmem>>, %arg4: memref<128x128xbf16, #tpu.memory_space<vmem>>, %arg5: memref<1x128xf32, #tpu.memory_space<vmem>>, %arg6: memref<128x128xbf16, #tpu.memory_space<vmem>>, %arg7: memref<1x128xf32, #tpu.memory_space<vmem>>, %arg8: memref<8x128xf32, #tpu.memory_space<vmem>>) attributes {dimension_semantics = [#tpu.dimension_semantics<parallel>], iteration_bounds = array<i64: 1>, scalar_prefetch = 0 : i64, scratch_operands = 0 : i64, tpu.core_type = #tpu.core_type<tc>, window_params = [{transform_indices = @transform_0, window_bounds = array<i64: 8, 128>}, {pipeline_mode = #tpu.pipeline_mode<synchronous>, transform_indices = @transform_1, window_bounds = array<i64: 128, 128>}, {pipeline_mode = #tpu.pipeline_mode<synchronous>, transform_indices = @transform_2, window_bounds = array<i64: 1, 128>}, {pipeline_mode = #tpu.pipeline_mode<synchronous>, transform_indices = @transform_3, window_bounds = array<i64: 128, 128>}, {pipeline_mode = #tpu.pipeline_mode<synchronous>, transform_indices = @transform_4, window_bounds = array<i64: 1, 128>}, {pipeline_mode = #tpu.pipeline_mode<synchronous>, transform_indices = @transform_5, window_bounds = array<i64: 128, 128>}, {pipeline_mode = #tpu.pipeline_mode<synchronous>, transform_indices = @transform_6, window_bounds = array<i64: 1, 128>}, {transform_indices = @transform_7, window_bounds = array<i64: 8, 128>}]} {
    %c0 = arith.constant 0 : index
    %c0_0 = arith.constant 0 : index
    %0 = vector.load %arg1[%c0, %c0_0] : memref<8x128xbf16, #tpu.memory_space<vmem>>, vector<8x128xbf16>
    %c0_1 = arith.constant 0 : index
    %c0_2 = arith.constant 0 : index
    %1 = vector.load %arg2[%c0_1, %c0_2] : memref<128x128xbf16, #tpu.memory_space<vmem>>, vector<128x128xbf16>
    %c0_3 = arith.constant 0 : index
    %c0_4 = arith.constant 0 : index
    %2 = vector.load %arg3[%c0_3, %c0_4] : memref<1x128xf32, #tpu.memory_space<vmem>>, vector<1x128xf32>
    %cst = arith.constant dense<0.000000e+00> : vector<8x128xf32>
    %3 = tpu.matmul %0, %1, %cst {dimension_numbers = #tpu.dot_dimension_numbers<[1], [0], [0], [1], [0, 0, 1, 1], [], []>} : vector<8x128xbf16>, vector<128x128xbf16>, vector<8x128xf32> -> vector<8x128xf32>
    %4 = vector.broadcast %2 : vector<1x128xf32> to vector<8x128xf32>
    %5 = arith.addf %3, %4 : vector<8x128xf32>
    %cst_5 = arith.constant 5.000000e-01 : f32
    %6 = vector.broadcast %cst_5 : f32 to vector<8x128xf32>
    %7 = arith.mulf %6, %5 : vector<8x128xf32>
    %8 = math.tanh %7 : vector<8x128xf32>
    %cst_6 = arith.constant 5.000000e-01 : f32
    %9 = vector.broadcast %cst_6 : f32 to vector<8x128xf32>
    %10 = arith.mulf %9, %8 : vector<8x128xf32>
    %cst_7 = arith.constant 5.000000e-01 : f32
    %11 = vector.broadcast %cst_7 : f32 to vector<8x128xf32>
    %12 = arith.addf %10, %11 : vector<8x128xf32>
    %13 = arith.truncf %12 : vector<8x128xf32> to vector<8x128xbf16>
    %c0_8 = arith.constant 0 : index
    %c0_9 = arith.constant 0 : index
    %14 = vector.load %arg4[%c0_8, %c0_9] : memref<128x128xbf16, #tpu.memory_space<vmem>>, vector<128x128xbf16>
    %c0_10 = arith.constant 0 : index
    %c0_11 = arith.constant 0 : index
    %15 = vector.load %arg5[%c0_10, %c0_11] : memref<1x128xf32, #tpu.memory_space<vmem>>, vector<1x128xf32>
    %cst_12 = arith.constant dense<0.000000e+00> : vector<8x128xf32>
    %16 = tpu.matmul %13, %14, %cst_12 {dimension_numbers = #tpu.dot_dimension_numbers<[1], [0], [0], [1], [0, 0, 1, 1], [], []>} : vector<8x128xbf16>, vector<128x128xbf16>, vector<8x128xf32> -> vector<8x128xf32>
    %17 = vector.broadcast %15 : vector<1x128xf32> to vector<8x128xf32>
    %18 = arith.addf %16, %17 : vector<8x128xf32>
    %cst_13 = arith.constant 5.000000e-01 : f32
    %19 = vector.broadcast %cst_13 : f32 to vector<8x128xf32>
    %20 = arith.mulf %19, %18 : vector<8x128xf32>
    %21 = math.tanh %20 : vector<8x128xf32>
    %cst_14 = arith.constant 5.000000e-01 : f32
    %22 = vector.broadcast %cst_14 : f32 to vector<8x128xf32>
    %23 = arith.mulf %22, %21 : vector<8x128xf32>
    %cst_15 = arith.constant 5.000000e-01 : f32
    %24 = vector.broadcast %cst_15 : f32 to vector<8x128xf32>
    %25 = arith.addf %23, %24 : vector<8x128xf32>
    %26 = arith.truncf %25 : vector<8x128xf32> to vector<8x128xbf16>
    %c0_16 = arith.constant 0 : index
    %c0_17 = arith.constant 0 : index
    %27 = vector.load %arg6[%c0_16, %c0_17] : memref<128x128xbf16, #tpu.memory_space<vmem>>, vector<128x128xbf16>
    %c0_18 = arith.constant 0 : index
    %c0_19 = arith.constant 0 : index
    %28 = vector.load %arg7[%c0_18, %c0_19] : memref<1x128xf32, #tpu.memory_space<vmem>>, vector<1x128xf32>
    %cst_20 = arith.constant dense<0.000000e+00> : vector<8x128xf32>
    %29 = tpu.matmul %26, %27, %cst_20 {dimension_numbers = #tpu.dot_dimension_numbers<[1], [0], [0], [1], [0, 0, 1, 1], [], []>} : vector<8x128xbf16>, vector<128x128xbf16>, vector<8x128xf32> -> vector<8x128xf32>
    %30 = vector.broadcast %28 : vector<1x128xf32> to vector<8x128xf32>
    %31 = arith.addf %29, %30 : vector<8x128xf32>
    %c0_21 = arith.constant 0 : index
    %c0_22 = arith.constant 0 : index
    %32 = vector.load %arg8[%c0_21, %c0_22] : memref<8x128xf32, #tpu.memory_space<vmem>>, vector<8x128xf32>
    tpu.vector_store %arg8[%c0_21, %c0_22], %31 {strides = array<i32>} : memref<8x128xf32, #tpu.memory_space<vmem>>, vector<8x128xf32>,
    return
  }
  func.func @transform_0(%arg0: i32) -> (i32, i32) {
    %c0_i32 = arith.constant 0 : i32
    %c0_i32_0 = arith.constant 0 : i32
    return %arg0, %c0_i32 : i32, i32
  }
  func.func @transform_1(%arg0: i32) -> (i32, i32) {
    %c0_i32 = arith.constant 0 : i32
    %c0_i32_0 = arith.constant 0 : i32
    %c0_i32_1 = arith.constant 0 : i32
    return %c0_i32, %c0_i32_0 : i32, i32
  }
  func.func @transform_2(%arg0: i32) -> (i32, i32) {
    %c0_i32 = arith.constant 0 : i32
    %c0_i32_0 = arith.constant 0 : i32
    %c0_i32_1 = arith.constant 0 : i32
    return %c0_i32, %c0_i32_0 : i32, i32
  }
  func.func @transform_3(%arg0: i32) -> (i32, i32) {
    %c0_i32 = arith.constant 0 : i32
    %c0_i32_0 = arith.constant 0 : i32
    %c0_i32_1 = arith.constant 0 : i32
    return %c0_i32, %c0_i32_0 : i32, i32
  }
  func.func @transform_4(%arg0: i32) -> (i32, i32) {
    %c0_i32 = arith.constant 0 : i32
    %c0_i32_0 = arith.constant 0 : i32
    %c0_i32_1 = arith.constant 0 : i32
    return %c0_i32, %c0_i32_0 : i32, i32
  }
  func.func @transform_5(%arg0: i32) -> (i32, i32) {
    %c0_i32 = arith.constant 0 : i32
    %c0_i32_0 = arith.constant 0 : i32
    %c0_i32_1 = arith.constant 0 : i32
    return %c0_i32, %c0_i32_0 : i32, i32
  }
  func.func @transform_6(%arg0: i32) -> (i32, i32) {
    %c0_i32 = arith.constant 0 : i32
    %c0_i32_0 = arith.constant 0 : i32
    %c0_i32_1 = arith.constant 0 : i32
    return %c0_i32, %c0_i32_0 : i32, i32
  }
  func.func @transform_7(%arg0: i32) -> (i32, i32) {
    %c0_i32 = arith.constant 0 : i32
    %c0_i32_0 = arith.constant 0 : i32
    return %arg0, %c0_i32 : i32, i32
  }
}

</mosaic_0001>

<llo_original>
// kernel: tpu_custom_call.1
$region0: #{tpu_custom_call.1}
  #allocation0 [shape = 'u32[]', space=smem, size = 0x4, offset = 0x4, fixed_abs, tag = 'smem constant byte address 0x4 - core index']
  #allocation1 [shape = 'u32[144,128]{1,0:T(1,128)}', space=vmem, size = 0x12000, scoped, tag = 'internal scratch']
  %s0 = inlined_call_operand.hbm [shape: bf16[8,128], index: 0, kind: input, shape index: {}]
  %s1 = inlined_call_operand.hbm [shape: bf16[128,128], index: 1, kind: input, shape index: {}]
  %s2 = inlined_call_operand.vmem [shape: f32[1,128], index: 2, kind: input, shape index: {}]
  %s3 = inlined_call_operand.hbm [shape: bf16[128,128], index: 3, kind: input, shape index: {}]
  %s4 = inlined_call_operand.vmem [shape: f32[1,128], index: 4, kind: input, shape index: {}]
  %s5 = inlined_call_operand.hbm [shape: bf16[128,128], index: 5, kind: input, shape index: {}]
  %s6 = inlined_call_operand.vmem [shape: f32[1,128], index: 6, kind: input, shape index: {}]
  %s7 = inlined_call_operand.hbm [shape: f32[8,128], index: 7, kind: output, shape index: {}]
  %s8 = sld [smem:[#allocation0]]
  $region54: #{tpu_custom_call.1} parent=0
    _
  %s10 = ssub.s32 1, %s8
  %s11 = scalar_select 0, %s10, %s8
  $region1: #{tpu_custom_call.1} parent=0
    #allocation2 [shape = 'u8[2048]{0}', space=vmem, size = 0x800, scoped, tag = 'input window, operand 0, single buffered']
    #allocation3 [shape = 's32[1]{0}', space=sflag, size = 0x4, scoped, tag = 'scoped memory for tpu_custom_call.1']
    #allocation4 [shape = 's32[1]{0}', space=sflag, size = 0x4, scoped, tag = 'scoped memory for tpu_custom_call.1']
    #allocation5 [shape = 'u8[32768]{0}', space=vmem, size = 0x8000, scoped, tag = 'input window, operand 1, single buffered']
    #allocation6 [shape = 's32[1]{0}', space=sflag, size = 0x4, scoped, tag = 'scoped memory for tpu_custom_call.1']
    #allocation7 [shape = 'u8[32768]{0}', space=vmem, size = 0x8000, scoped, tag = 'input window, operand 3, single buffered']
    #allocation8 [shape = 'u8[32768]{0}', space=vmem, size = 0x8000, scoped, tag = 'input window, operand 5, single buffered']
    #allocation9 [shape = 's32[1]{0}', space=sflag, size = 0x4, scoped, tag = 'scoped memory for tpu_custom_call.1']
    #allocation10 [shape = 'u8[4096]{0}', space=vmem, size = 0x1000, scoped, tag = 'output window, operand 0, single buffered']
    %12 = vsyncpa [#allocation3], 0
    %13 = vsyncpa [#allocation6], 0
    %14 = vsyncpa [#allocation9], 0
    %15 = vsyncpa [#allocation4], 0
    // Predicated region
    $region2: #{tpu_custom_call.1} parent=1 // pred_check
      _
    $region3: #{tpu_custom_call.1} parent=1 // pred_check_branch
      %17 = sbr.rel (0) target = $region5
    $region4: #{tpu_custom_call.1} parent=1 // pred_region
      %s19 = ssub.s32 64, 64
      %20 = vsyncadd [#allocation3], %s19
      %s22 = sshll.u32 [#allocation2], 4
      %s23 = int_to_ptr.vmem [resolvable:$true] %s22
      %25 = dma.hbm_to_vmem [thread:$0]  %s0, 64, %s23, [#allocation3]
    $region5: #{tpu_custom_call.1} parent=1 // pred_fallthru
      _
    // Predicated region
    $region6: #{tpu_custom_call.1} parent=1 // pred_check
      _
    $region7: #{tpu_custom_call.1} parent=1 // pred_check_branch
      %27 = sbr.rel (0) target = $region9
    $region8: #{tpu_custom_call.1} parent=1 // pred_region
      %s29 = ssub.s32 1024, 1024
      %30 = vsyncadd [#allocation6], %s29
      %s31 = sshll.u32 [#allocation5], 4
      %s32 = int_to_ptr.vmem [resolvable:$true] %s31
      %37 = dma.hbm_to_vmem [thread:$0]  %s1, 1024, %s32, [#allocation6], 64, 64, 4
    $region9: #{tpu_custom_call.1} parent=1 // pred_fallthru
      _
    // Predicated region
    $region10: #{tpu_custom_call.1} parent=1 // pred_check
      _
    $region11: #{tpu_custom_call.1} parent=1 // pred_check_branch
      %39 = sbr.rel (0) target = $region13
    $region12: #{tpu_custom_call.1} parent=1 // pred_region
      _
    $region13: #{tpu_custom_call.1} parent=1 // pred_fallthru
      _
    // Predicated region
    $region14: #{tpu_custom_call.1} parent=1 // pred_check
      _
    $region15: #{tpu_custom_call.1} parent=1 // pred_check_branch
      %41 = sbr.rel (0) target = $region17
    $region16: #{tpu_custom_call.1} parent=1 // pred_region
      %s43 = ssub.s32 1024, 1024
      %44 = vsyncadd [#allocation6], %s43
      %s45 = sshll.u32 [#allocation7], 4
      %s46 = int_to_ptr.vmem [resolvable:$true] %s45
      %51 = dma.hbm_to_vmem [thread:$0]  %s3, 1024, %s46, [#allocation6], 64, 64, 4
    $region17: #{tpu_custom_call.1} parent=1 // pred_fallthru
      _
    // Predicated region
    $region18: #{tpu_custom_call.1} parent=1 // pred_check
      _
    $region19: #{tpu_custom_call.1} parent=1 // pred_check_branch
      %53 = sbr.rel (0) target = $region21
    $region20: #{tpu_custom_call.1} parent=1 // pred_region
      _
    $region21: #{tpu_custom_call.1} parent=1 // pred_fallthru
      _
    // Predicated region
    $region22: #{tpu_custom_call.1} parent=1 // pred_check
      _
    $region23: #{tpu_custom_call.1} parent=1 // pred_check_branch
      %55 = sbr.rel (0) target = $region25
    $region24: #{tpu_custom_call.1} parent=1 // pred_region
      %s57 = ssub.s32 1024, 1024
      %58 = vsyncadd [#allocation9], %s57
      %s59 = sshll.u32 [#allocation8], 4
      %s60 = int_to_ptr.vmem [resolvable:$true] %s59
      %65 = dma.hbm_to_vmem [thread:$0]  %s5, 1024, %s60, [#allocation9], 64, 64, 4
    $region25: #{tpu_custom_call.1} parent=1 // pred_fallthru
      _
    // Predicated region
    $region26: #{tpu_custom_call.1} parent=1 // pred_check
      _
    $region27: #{tpu_custom_call.1} parent=1 // pred_check_branch
      %67 = sbr.rel (0) target = $region29
    $region28: #{tpu_custom_call.1} parent=1 // pred_region
      _
    $region29: #{tpu_custom_call.1} parent=1 // pred_fallthru
      _
    // Predicated region
    $region30: #{tpu_custom_call.1} parent=1 // pred_check
      _
    $region31: #{tpu_custom_call.1} parent=1 // pred_check_branch
      %69 = sbr.rel (0) target = $region33
    $region32: #{tpu_custom_call.1} parent=1 // pred_region
      %70 = dma.done [#allocation3], 64
    $region33: #{tpu_custom_call.1} parent=1 // pred_fallthru
      _
    // Predicated region
    $region34: #{tpu_custom_call.1} parent=1 // pred_check
      _
    $region35: #{tpu_custom_call.1} parent=1 // pred_check_branch
      %72 = sbr.rel (0) target = $region37
    $region36: #{tpu_custom_call.1} parent=1 // pred_region
      %73 = dma.done [#allocation6], 1024
    $region37: #{tpu_custom_call.1} parent=1 // pred_fallthru
      _
    // Predicated region
    $region38: #{tpu_custom_call.1} parent=1 // pred_check
      _
    $region39: #{tpu_custom_call.1} parent=1 // pred_check_branch
      %75 = sbr.rel (0) target = $region41
    $region40: #{tpu_custom_call.1} parent=1 // pred_region
      %76 = dma.done [#allocation6], 1024
    $region41: #{tpu_custom_call.1} parent=1 // pred_fallthru
      _
    // Predicated region
    $region42: #{tpu_custom_call.1} parent=1 // pred_check
      _
    $region43: #{tpu_custom_call.1} parent=1 // pred_check_branch
      %78 = sbr.rel (0) target = $region45
    $region44: #{tpu_custom_call.1} parent=1 // pred_region
      %79 = dma.done [#allocation9], 1024
    $region45: #{tpu_custom_call.1} parent=1 // pred_fallthru
      _
    %v81 = vld [vmem:[#allocation2] sm:$0xf]
    %v82 = vld [vmem:[#allocation5] sm:$0xf]
    %v83 = vld [vmem:[#allocation5 + $0x4] sm:$0xf]
    %v84 = vld [vmem:[#allocation5 + $0x8] sm:$0xf]
    %v85 = vld [vmem:[#allocation5 + $0xc] sm:$0xf]
    %v86 = vld [vmem:[#allocation5 + $0x10] sm:$0xf]
    %v87 = vld [vmem:[#allocation5 + $0x14] sm:$0xf]
    %v88 = vld [vmem:[#allocation5 + $0x18] sm:$0xf]
    %v89 = vld [vmem:[#allocation5 + $0x1c] sm:$0xf]
    %v90 = vld [vmem:[#allocation5 + $0x20] sm:$0xf]
    %v91 = vld [vmem:[#allocation5 + $0x24] sm:$0xf]
    %v92 = vld [vmem:[#allocation5 + $0x28] sm:$0xf]
    %v93 = vld [vmem:[#allocation5 + $0x2c] sm:$0xf]
    %v94 = vld [vmem:[#allocation5 + $0x30] sm:$0xf]
    %v95 = vld [vmem:[#allocation5 + $0x34] sm:$0xf]
    %v96 = vld [vmem:[#allocation5 + $0x38] sm:$0xf]
    %v97 = vld [vmem:[#allocation5 + $0x3c] sm:$0xf]
    %v98 = vld [vmem:[%s2] sm:$0x1]
    %v100 = vlaneseq
    %v101 = vshrl.u32 %v100, 7
    %v102 = vsub.s32 0, %v101
    %v103 = vrot.slane %v98, %v102
    %v121 = vunpack.c.l.b16 %v82
    %v122 = vunpack.c.l.b16 %v83
    %v123 = vunpack.c.l.b16 %v84
    %v124 = vunpack.c.l.b16 %v85
    %v125 = vunpack.c.l.b16 %v86
    %v126 = vunpack.c.l.b16 %v87
    %v127 = vunpack.c.l.b16 %v88
    %v128 = vunpack.c.l.b16 %v89
    %v129 = vunpack.c.l.b16 %v90
    %v130 = vunpack.c.l.b16 %v91
    %v131 = vunpack.c.l.b16 %v92
    %v132 = vunpack.c.l.b16 %v93
    %v133 = vunpack.c.l.b16 %v94
    %v134 = vunpack.c.l.b16 %v95
    %v135 = vunpack.c.l.b16 %v96
    %v136 = vunpack.c.l.b16 %v97
    %v137 = vpack.c.b16 %v122, %v121
    %v138 = vpack.c.b16 %v124, %v123
    %v139 = vpack.c.b16 %v126, %v125
    %v140 = vpack.c.b16 %v128, %v127
    %v141 = vpack.c.b16 %v130, %v129
    %v142 = vpack.c.b16 %v132, %v131
    %v143 = vpack.c.b16 %v134, %v133
    %v144 = vpack.c.b16 %v136, %v135
    %153 = vmatprep.subr.bf16.mxu0 0
    %154 = vmatpush1.bf16.msra.mxu0 %v137
    %155 = vmatprep.subr.bf16.mxu0 0
    %156 = vmatpush1.bf16.msra.mxu0 %v138
    %157 = vmatprep.subr.bf16.mxu0 0
    %158 = vmatpush1.bf16.msra.mxu0 %v139
    %159 = vmatprep.subr.bf16.mxu0 0
    %160 = vmatpush1.bf16.msra.mxu0 %v140
    %161 = vmatprep.subr.bf16.mxu0 0
    %162 = vmatpush1.bf16.msra.mxu0 %v141
    %163 = vmatprep.subr.bf16.mxu0 0
    %164 = vmatpush1.bf16.msra.mxu0 %v142
    %165 = vmatprep.subr.bf16.mxu0 0
    %166 = vmatpush1.bf16.msra.mxu0 %v143
    %167 = vmatprep.subr.bf16.mxu0 0
    %168 = vmatpush1.bf16.msra.mxu0 %v144
    %169 = vmatprep.subr.bf16.mxu0 0
    %170 = vmatpush1.bf16.msra.mxu0 0
    %171 = vmatprep.subr.bf16.mxu0 0
    %172 = vmatpush1.bf16.msra.mxu0 0
    %173 = vmatprep.subr.bf16.mxu0 0
    %174 = vmatpush1.bf16.msra.mxu0 0
    %175 = vmatprep.subr.bf16.mxu0 0
    %176 = vmatpush1.bf16.msra.mxu0 0
    %177 = vmatprep.subr.bf16.mxu0 0
    %178 = vmatpush1.bf16.msra.mxu0 0
    %179 = vmatprep.subr.bf16.mxu0 0
    %180 = vmatpush1.bf16.msra.mxu0 0
    %181 = vmatprep.subr.bf16.mxu0 0
    %182 = vmatpush1.bf16.msra.mxu0 0
    %183 = vmatprep.subr.bf16.mxu0 0
    %184 = vmatpush1.bf16.msra.mxu0 0
    %185 = vmatprep.mubr.bf16.mxu0 0
    %186 = vmatmul.mubr.bf16.gmra.mrb[0].mxu0 %v81
    %v187 = vpop.f32.mrb[0].mxu0
    %v188 = vadd.f32 %v103, %v187
    %v189 = vpop.f32.mrb[0].mxu0
    %v190 = vpop.f32.mrb[0].mxu0
    %v191 = vpop.f32.mrb[0].mxu0
    %192 = vdwg.mxu0
    %v193 = vmul.f32 %v188, 0.5
    %v194 = vtanh.pop %v193
    %v195 = vmul.f32 %v194, 0.5
    %v196 = vadd.f32 %v195, 0.5
    %v197 = vpack.c.bf16 %v196, %v196
    %v198 = vld [vmem:[#allocation7] sm:$0xf]
    %v199 = vld [vmem:[#allocation7 + $0x4] sm:$0xf]
    %v200 = vld [vmem:[#allocation7 + $0x8] sm:$0xf]
    %v201 = vld [vmem:[#allocation7 + $0xc] sm:$0xf]
    %v202 = vld [vmem:[#allocation7 + $0x10] sm:$0xf]
    %v203 = vld [vmem:[#allocation7 + $0x14] sm:$0xf]
    %v204 = vld [vmem:[#allocation7 + $0x18] sm:$0xf]
    %v205 = vld [vmem:[#allocation7 + $0x1c] sm:$0xf]
    %v206 = vld [vmem:[#allocation7 + $0x20] sm:$0xf]
    %v207 = vld [vmem:[#allocation7 + $0x24] sm:$0xf]
    %v208 = vld [vmem:[#allocation7 + $0x28] sm:$0xf]
    %v209 = vld [vmem:[#allocation7 + $0x2c] sm:$0xf]
    %v210 = vld [vmem:[#allocation7 + $0x30] sm:$0xf]
    %v211 = vld [vmem:[#allocation7 + $0x34] sm:$0xf]
    %v212 = vld [vmem:[#allocation7 + $0x38] sm:$0xf]
    %v213 = vld [vmem:[#allocation7 + $0x3c] sm:$0xf]
    %v214 = vld [vmem:[%s4] sm:$0x1]
    %v216 = vlaneseq
    %v217 = vshrl.u32 %v216, 7
    %v218 = vsub.s32 0, %v217
    %v219 = vrot.slane %v214, %v218
    %v237 = vunpack.c.l.b16 %v198
    %v238 = vunpack.c.l.b16 %v199
    %v239 = vunpack.c.l.b16 %v200
    %v240 = vunpack.c.l.b16 %v201
    %v241 = vunpack.c.l.b16 %v202
    %v242 = vunpack.c.l.b16 %v203
    %v243 = vunpack.c.l.b16 %v204
    %v244 = vunpack.c.l.b16 %v205
    %v245 = vunpack.c.l.b16 %v206
    %v246 = vunpack.c.l.b16 %v207
    %v247 = vunpack.c.l.b16 %v208
    %v248 = vunpack.c.l.b16 %v209
    %v249 = vunpack.c.l.b16 %v210
    %v250 = vunpack.c.l.b16 %v211
    %v251 = vunpack.c.l.b16 %v212
    %v252 = vunpack.c.l.b16 %v213
    %v253 = vpack.c.b16 %v238, %v237
    %v254 = vpack.c.b16 %v240, %v239
    %v255 = vpack.c.b16 %v242, %v241
    %v256 = vpack.c.b16 %v244, %v243
    %v257 = vpack.c.b16 %v246, %v245
    %v258 = vpack.c.b16 %v248, %v247
    %v259 = vpack.c.b16 %v250, %v249
    %v260 = vpack.c.b16 %v252, %v251
    %269 = vmatprep.subr.bf16.mxu0 0
    %270 = vmatpush1.bf16.msra.mxu0 %v253
    %271 = vmatprep.subr.bf16.mxu0 0
    %272 = vmatpush1.bf16.msra.mxu0 %v254
    %273 = vmatprep.subr.bf16.mxu0 0
    %274 = vmatpush1.bf16.msra.mxu0 %v255
    %275 = vmatprep.subr.bf16.mxu0 0
    %276 = vmatpush1.bf16.msra.mxu0 %v256
    %277 = vmatprep.subr.bf16.mxu0 0
    %278 = vmatpush1.bf16.msra.mxu0 %v257
    %279 = vmatprep.subr.bf16.mxu0 0
    %280 = vmatpush1.bf16.msra.mxu0 %v258
    %281 = vmatprep.subr.bf16.mxu0 0
    %282 = vmatpush1.bf16.msra.mxu0 %v259
    %283 = vmatprep.subr.bf16.mxu0 0
    %284 = vmatpush1.bf16.msra.mxu0 %v260
    %285 = vmatprep.subr.bf16.mxu0 0
    %286 = vmatpush1.bf16.msra.mxu0 0
    %287 = vmatprep.subr.bf16.mxu0 0
    %288 = vmatpush1.bf16.msra.mxu0 0
    %289 = vmatprep.subr.bf16.mxu0 0
    %290 = vmatpush1.bf16.msra.mxu0 0
    %291 = vmatprep.subr.bf16.mxu0 0
    %292 = vmatpush1.bf16.msra.mxu0 0
    %293 = vmatprep.subr.bf16.mxu0 0
    %294 = vmatpush1.bf16.msra.mxu0 0
    %295 = vmatprep.subr.bf16.mxu0 0
    %296 = vmatpush1.bf16.msra.mxu0 0
    %297 = vmatprep.subr.bf16.mxu0 0
    %298 = vmatpush1.bf16.msra.mxu0 0
    %299 = vmatprep.subr.bf16.mxu0 0
    %300 = vmatpush1.bf16.msra.mxu0 0
    %301 = vmatprep.mubr.bf16.mxu0 0
    %302 = vmatmul.mubr.bf16.gmra.mrb[0].mxu0 %v197
    %v303 = vpop.f32.mrb[0].mxu0
    %v304 = vadd.f32 %v219, %v303
    %v305 = vpop.f32.mrb[0].mxu0
    %v306 = vpop.f32.mrb[0].mxu0
    %v307 = vpop.f32.mrb[0].mxu0
    %308 = vdwg.mxu0
    %v309 = vmul.f32 %v304, 0.5
    %v310 = vtanh.pop %v309
    %v311 = vmul.f32 %v310, 0.5
    %v312 = vadd.f32 %v311, 0.5
    %v313 = vpack.c.bf16 %v312, %v312
    %v314 = vld [vmem:[#allocation8] sm:$0xf]
    %v315 = vld [vmem:[#allocation8 + $0x4] sm:$0xf]
    %v316 = vld [vmem:[#allocation8 + $0x8] sm:$0xf]
    %v317 = vld [vmem:[#allocation8 + $0xc] sm:$0xf]
    %v318 = vld [vmem:[#allocation8 + $0x10] sm:$0xf]
    %v319 = vld [vmem:[#allocation8 + $0x14] sm:$0xf]
    %v320 = vld [vmem:[#allocation8 + $0x18] sm:$0xf]
    %v321 = vld [vmem:[#allocation8 + $0x1c] sm:$0xf]
    %v322 = vld [vmem:[#allocation8 + $0x20] sm:$0xf]
    %v323 = vld [vmem:[#allocation8 + $0x24] sm:$0xf]
    %v324 = vld [vmem:[#allocation8 + $0x28] sm:$0xf]
    %v325 = vld [vmem:[#allocation8 + $0x2c] sm:$0xf]
    %v326 = vld [vmem:[#allocation8 + $0x30] sm:$0xf]
    %v327 = vld [vmem:[#allocation8 + $0x34] sm:$0xf]
    %v328 = vld [vmem:[#allocation8 + $0x38] sm:$0xf]
    %v329 = vld [vmem:[#allocation8 + $0x3c] sm:$0xf]
    %v330 = vld [vmem:[%s6] sm:$0x1]
    %v332 = vlaneseq
    %v333 = vshrl.u32 %v332, 7
    %v334 = vsub.s32 0, %v333
    %v335 = vrot.slane %v330, %v334
    %v353 = vunpack.c.l.b16 %v314
    %v354 = vunpack.c.l.b16 %v315
    %v355 = vunpack.c.l.b16 %v316
    %v356 = vunpack.c.l.b16 %v317
    %v357 = vunpack.c.l.b16 %v318
    %v358 = vunpack.c.l.b16 %v319
    %v359 = vunpack.c.l.b16 %v320
    %v360 = vunpack.c.l.b16 %v321
    %v361 = vunpack.c.l.b16 %v322
    %v362 = vunpack.c.l.b16 %v323
    %v363 = vunpack.c.l.b16 %v324
    %v364 = vunpack.c.l.b16 %v325
    %v365 = vunpack.c.l.b16 %v326
    %v366 = vunpack.c.l.b16 %v327
    %v367 = vunpack.c.l.b16 %v328
    %v368 = vunpack.c.l.b16 %v329
    %v369 = vpack.c.b16 %v354, %v353
    %v370 = vpack.c.b16 %v356, %v355
    %v371 = vpack.c.b16 %v358, %v357
    %v372 = vpack.c.b16 %v360, %v359
    %v373 = vpack.c.b16 %v362, %v361
    %v374 = vpack.c.b16 %v364, %v363
    %v375 = vpack.c.b16 %v366, %v365
    %v376 = vpack.c.b16 %v368, %v367
    %385 = vmatprep.subr.bf16.mxu0 0
    %386 = vmatpush1.bf16.msra.mxu0 %v369
    %387 = vmatprep.subr.bf16.mxu0 0
    %388 = vmatpush1.bf16.msra.mxu0 %v370
    %389 = vmatprep.subr.bf16.mxu0 0
    %390 = vmatpush1.bf16.msra.mxu0 %v371
    %391 = vmatprep.subr.bf16.mxu0 0
    %392 = vmatpush1.bf16.msra.mxu0 %v372
    %393 = vmatprep.subr.bf16.mxu0 0
    %394 = vmatpush1.bf16.msra.mxu0 %v373
    %395 = vmatprep.subr.bf16.mxu0 0
    %396 = vmatpush1.bf16.msra.mxu0 %v374
    %397 = vmatprep.subr.bf16.mxu0 0
    %398 = vmatpush1.bf16.msra.mxu0 %v375
    %399 = vmatprep.subr.bf16.mxu0 0
    %400 = vmatpush1.bf16.msra.mxu0 %v376
    %401 = vmatprep.subr.bf16.mxu0 0
    %402 = vmatpush1.bf16.msra.mxu0 0
    %403 = vmatprep.subr.bf16.mxu0 0
    %404 = vmatpush1.bf16.msra.mxu0 0
    %405 = vmatprep.subr.bf16.mxu0 0
    %406 = vmatpush1.bf16.msra.mxu0 0
    %407 = vmatprep.subr.bf16.mxu0 0
    %408 = vmatpush1.bf16.msra.mxu0 0
    %409 = vmatprep.subr.bf16.mxu0 0
    %410 = vmatpush1.bf16.msra.mxu0 0
    %411 = vmatprep.subr.bf16.mxu0 0
    %412 = vmatpush1.bf16.msra.mxu0 0
    %413 = vmatprep.subr.bf16.mxu0 0
    %414 = vmatpush1.bf16.msra.mxu0 0
    %415 = vmatprep.subr.bf16.mxu0 0
    %416 = vmatpush1.bf16.msra.mxu0 0
    %417 = vmatprep.mubr.bf16.mxu0 0
    %418 = vmatmul.mubr.bf16.gmra.mrb[0].mxu0 %v313
    %v419 = vpop.f32.mrb[0].mxu0
    %v420 = vadd.f32 %v335, %v419
    %v421 = vpop.f32.mrb[0].mxu0
    %v422 = vpop.f32.mrb[0].mxu0
    %v423 = vpop.f32.mrb[0].mxu0
    %424 = vdwg.mxu0
    %425 = vst [vmem:[#allocation10] sm:$0xff] %v420
    // Predicated region
    $region46: #{tpu_custom_call.1} parent=1 // pred_check
      _
    $region47: #{tpu_custom_call.1} parent=1 // pred_check_branch
      %427 = sbr.rel (0) target = $region49
    $region48: #{tpu_custom_call.1} parent=1 // pred_region
      %s429 = ssub.s32 128, 128
      %430 = vsyncadd [#allocation4], %s429
      %s432 = sshll.u32 [#allocation10], 4
      %s433 = int_to_ptr.vmem [resolvable:$true] %s432
      %435 = dma.vmem_to_hbm [thread:$0]  %s433, 128, %s7, [#allocation4]
    $region49: #{tpu_custom_call.1} parent=1 // pred_fallthru
      _
    // Predicated region
    $region50: #{tpu_custom_call.1} parent=1 // pred_check
      _
    $region51: #{tpu_custom_call.1} parent=1 // pred_check_branch
      %437 = sbr.rel (0) target = $region53
    $region52: #{tpu_custom_call.1} parent=1 // pred_region
      %438 = dma.done [#allocation4], 128
    $region53: #{tpu_custom_call.1} parent=1 // pred_fallthru
      _
    %439 = vsyncpa [#allocation3], 1
    %440 = vsyncpa [#allocation6], 1
    %441 = vsyncpa [#allocation9], 1
    %442 = vsyncpa [#allocation4], 1

</llo_original>
